<compile_context>
chip_gen: v6e
topology: v6e:2x2x1
jax: 0.10.0
libtpu: 0.0.40
codegen_flags: <defaults>
</compile_context>

<pallas_src>
import jax
import jax.numpy as jnp
from jax.experimental import pallas as pl
from jax.experimental.pallas import tpu as pltpu

HIDDEN = 100        # logical hidden size (matches torch BaseNN)
HIDDEN_PAD = 128    # padded to a full MXU / lane width; extra units are zero


def _round_up(x, m):
    return (x + m - 1) // m * m


def _choose_tb(B, n_in, x_itemsize):
    # Per-grid-step overhead is ~0.35 us, so tiles should be as large as VMEM allows.
    # Dominant VMEM user is the f32 hidden activation (HIDDEN_PAD, tb) = tb*512 B;
    # cap it at ~8 MiB (tb <= 16384).  Also keep the streamed x tile <= ~4 MiB for
    # large n_in.  With double buffering and temporaries this stays well under the
    # 40 MiB scoped-VMEM limit requested below on v5e / v6e / v7x.
    tb = min((8 << 20) // (HIDDEN_PAD * 4),
             (4 << 20) // max(1, n_in * int(x_itemsize)),
             32768)
    tb = max(128, (tb // 128) * 128)
    if B >= 256:
        # Keep at least 2 grid steps so v7x's two TensorCores both get work.
        tb = min(tb, _round_up(-(-B // 2), 128))
    if tb >= B:
        tb = B  # single block spanning the whole (small) batch; block == full dim
    return tb


def base_nn_kernel(xT_ref, w1T_ref, b1_ref, w2_ref, b2_ref, o_ref):
    # xT : (n_in, TB)       batch on lanes, streamed/pipelined per grid step
    # w1T: (HIDDEN_PAD, n_in) bf16, VMEM-resident across the whole grid
    # b1 : (HIDDEN_PAD, 1) f32,  VMEM-resident
    # w2 : (HIDDEN_PAD, 1) f32,  VMEM-resident (used on the VPU path)
    # b2 : (1, 1) f32 scalar in SMEM
    # o  : (1, TB)          lane-dense store
    x_bf16 = xT_ref[...].astype(jnp.bfloat16)   # cast in-kernel: HBM read stays at source dtype
    h = jnp.dot(w1T_ref[...], x_bf16, preferred_element_type=jnp.float32)  # (128, TB) f32 acc
    h = jnp.maximum(h + b1_ref[...], 0.0)       # bias + ReLU in f32 on the VPU
    # Layer 2: a (1,128)@(128,TB) dot would use 1/128 of the MXU's output rows;
    # do it as a VPU multiply + XLU cross-sublane sum instead (both have slack here).
    out = jnp.sum(h * w2_ref[...], axis=0, keepdims=True)                  # (1, TB)
    o_ref[...] = (out + b2_ref[0, 0]).astype(o_ref.dtype)


def prepare_params(w1, b1, w2, b2):
    """Build the padded / dtype-cast parameter set ONCE (outside the per-call hot path).

    w1: (n_inputs, 100), b1: (100,), w2: (100, 1), b2: scalar-like.
    Hidden units 100..127 get zero weights/bias, so padding is bit-exact.
    """
    n_in = w1.shape[0]
    w1T = (jnp.zeros((HIDDEN_PAD, n_in), jnp.float32)
           .at[:HIDDEN, :].set(jnp.asarray(w1, jnp.float32).T)
           .astype(jnp.bfloat16))                                   # MXU operand -> bf16
    b1c = jnp.zeros((HIDDEN_PAD, 1), jnp.float32).at[:HIDDEN, 0].set(
        jnp.asarray(b1, jnp.float32))
    w2c = jnp.zeros((HIDDEN_PAD, 1), jnp.float32).at[:HIDDEN, 0].set(
        jnp.asarray(w2, jnp.float32).reshape(-1))                   # stays f32 (VPU path)
    b2s = jnp.asarray(b2, jnp.float32).reshape(1, 1)
    return w1T, b1c, w2c, b2s


def base_nn_forward_feature_major(x_fm, params):
    """Fast path: x_fm is feature-major (n_inputs, B) and feeds the kernel zero-copy
    (no transpose or pad of x anywhere).  Returns (B, 1) f32."""
    w1T, b1c, w2c, b2s = params
    n_in, B = x_fm.shape
    tb = _choose_tb(B, n_in, x_fm.dtype.itemsize)
    grid = (pl.cdiv(B, tb),)

    weight_bytes = (w1T.size * w1T.dtype.itemsize
                    + b1c.size * 4 + w2c.size * 4 + 4)
    cost = pl.CostEstimate(
        flops=2 * B * (n_in * HIDDEN + HIDDEN),
        transcendentals=0,
        bytes_accessed=B * n_in * x_fm.dtype.itemsize + B * 4 + weight_bytes,
    )

    out = pl.pallas_call(
        base_nn_kernel,
        out_shape=jax.ShapeDtypeStruct((1, B), jnp.float32),
        grid=grid,
        in_specs=[
            pl.BlockSpec((n_in, tb), lambda i: (0, i)),          # x tile (streamed/pipelined)
            pl.BlockSpec((HIDDEN_PAD, n_in), lambda i: (0, 0)),  # fc1 weight (VMEM-resident)
            pl.BlockSpec((HIDDEN_PAD, 1), lambda i: (0, 0)),     # fc1 bias   (VMEM-resident)
            pl.BlockSpec((HIDDEN_PAD, 1), lambda i: (0, 0)),     # fc2 weight (VMEM-resident)
            pl.BlockSpec(memory_space=pltpu.MemorySpace.SMEM),   # fc2 bias (scalar)
        ],
        out_specs=pl.BlockSpec((1, tb), lambda i: (0, i)),       # lane-dense store
        compiler_params=pltpu.CompilerParams(
            dimension_semantics=("parallel",),   # shard batch tiles across TCs (v7x)
            vmem_limit_bytes=40 * 1024 * 1024,   # headroom for the (128, tb) f32 hidden act
        ),
        cost_estimate=cost,
    )(x_fm, w1T, b1c, w2c, b2s)

    return out.reshape(B, 1)


def base_nn_forward(x, params):
    """Torch-compatible entry: x is (B, n_inputs), returns (B, 1).

    The transpose to feature-major costs one extra HBM pass over x; callers with
    large / repeated batches should store x feature-major and call
    base_nn_forward_feature_major directly (zero-copy)."""
    return base_nn_forward_feature_major(x.T, params)


def init_params(key, n_inputs):
    """Deterministic init matching torch.nn.Linear's U(-1/sqrt(fan_in), 1/sqrt(fan_in))."""
    k1, k2, k3, k4 = jax.random.split(key, 4)
    bound1 = 1.0 / jnp.sqrt(jnp.float32(n_inputs))
    bound2 = 1.0 / jnp.sqrt(jnp.float32(HIDDEN))
    # stored as (in, out) == transpose of torch's (out, in)
    w1 = jax.random.uniform(k1, (n_inputs, HIDDEN), jnp.float32, -bound1, bound1)
    b1 = jax.random.uniform(k2, (HIDDEN,), jnp.float32, -bound1, bound1)
    w2 = jax.random.uniform(k3, (HIDDEN, 1), jnp.float32, -bound2, bound2)
    b2 = jax.random.uniform(k4, (1, 1), jnp.float32, -bound2, bound2)
    return w1, b1, w2, b2


if __name__ == "__main__":
    key = jax.random.PRNGKey(0)
    kx, kp = jax.random.split(key)

    batch, n_inputs = 8, 4
    x = jax.random.normal(kx, (batch, n_inputs), jnp.float32)
    w1, b1, w2, b2 = init_params(kp, n_inputs)

    params = prepare_params(w1, b1, w2, b2)       # padded / bf16 weights, built once
    out = base_nn_forward(x, params)
    out = jax.block_until_ready(out)

    # reference check in plain f32 JAX
    ref = jnp.maximum(x @ w1 + b1[None, :], 0.0) @ w2 + b2
    assert out.shape == (batch, 1)
    # bf16 MXU operands with f32 accumulation -> ~1e-3 relative error expected.
    assert jnp.allclose(out, ref, atol=1e-2, rtol=1e-2)

    print("KERNEL_OK")
</pallas_src>

<mosaic_0001>
module attributes {stable_mosaic.version = 11 : i64} {
  func.func @base_nn_kernel(%arg0: i32, %arg1: memref<4x8xf32, #tpu.memory_space<vmem>>, %arg2: memref<128x4xbf16, #tpu.memory_space<vmem>>, %arg3: memref<128x1xf32, #tpu.memory_space<vmem>>, %arg4: memref<128x1xf32, #tpu.memory_space<vmem>>, %arg5: memref<1x1xf32, #tpu.memory_space<smem>>, %arg6: memref<1x8xf32, #tpu.memory_space<vmem>>) attributes {dimension_semantics = [#tpu.dimension_semantics<parallel>], iteration_bounds = array<i64: 1>, scalar_prefetch = 0 : i64, scratch_operands = 0 : i64, tpu.core_type = #tpu.core_type<tc>, window_params = [{transform_indices = @transform_0, window_bounds = array<i64: 4, 8>}, {pipeline_mode = #tpu.pipeline_mode<synchronous>, transform_indices = @transform_1, window_bounds = array<i64: 128, 4>}, {pipeline_mode = #tpu.pipeline_mode<synchronous>, transform_indices = @transform_2, window_bounds = array<i64: 128, 1>}, {pipeline_mode = #tpu.pipeline_mode<synchronous>, transform_indices = @transform_3, window_bounds = array<i64: 128, 1>}, {transform_indices = @transform_4, window_bounds = array<i64: 1, 1>}, {transform_indices = @transform_5, window_bounds = array<i64: 1, 8>}]} {
    %c0 = arith.constant 0 : index
    %c0_0 = arith.constant 0 : index
    %0 = vector.load %arg1[%c0, %c0_0] : memref<4x8xf32, #tpu.memory_space<vmem>>, vector<4x8xf32>
    %1 = arith.truncf %0 : vector<4x8xf32> to vector<4x8xbf16>
    %c0_1 = arith.constant 0 : index
    %c0_2 = arith.constant 0 : index
    %2 = vector.load %arg2[%c0_1, %c0_2] : memref<128x4xbf16, #tpu.memory_space<vmem>>, vector<128x4xbf16>
    %cst = arith.constant dense<0.000000e+00> : vector<128x8xf32>
    %3 = tpu.matmul %2, %1, %cst {dimension_numbers = #tpu.dot_dimension_numbers<[1], [0], [0], [1], [0, 0, 1, 1], [], []>} : vector<128x4xbf16>, vector<4x8xbf16>, vector<128x8xf32> -> vector<128x8xf32>
    %c0_3 = arith.constant 0 : index
    %c0_4 = arith.constant 0 : index
    %4 = vector.load %arg3[%c0_3, %c0_4] : memref<128x1xf32, #tpu.memory_space<vmem>>, vector<128x1xf32>
    %5 = vector.broadcast %4 : vector<128x1xf32> to vector<128x8xf32>
    %6 = arith.addf %3, %5 : vector<128x8xf32>
    %cst_5 = arith.constant 0.000000e+00 : f32
    %7 = vector.broadcast %cst_5 : f32 to vector<128x8xf32>
    %8 = arith.maximumf %6, %7 : vector<128x8xf32>
    %c0_6 = arith.constant 0 : index
    %c0_7 = arith.constant 0 : index
    %9 = vector.load %arg4[%c0_6, %c0_7] : memref<128x1xf32, #tpu.memory_space<vmem>>, vector<128x1xf32>
    %10 = vector.broadcast %9 : vector<128x1xf32> to vector<128x8xf32>
    %11 = arith.mulf %8, %10 : vector<128x8xf32>
    %cst_8 = arith.constant dense<0.000000e+00> : vector<8xf32>
    %12 = vector.multi_reduction <add>, %11, %cst_8 [0] : vector<128x8xf32> to vector<8xf32>
    %13 = vector.shape_cast %12 : vector<8xf32> to vector<1x8xf32>
    %c0_9 = arith.constant 0 : index
    %c0_10 = arith.constant 0 : index
    %14 = memref.load %arg5[%c0_9, %c0_10] : memref<1x1xf32, #tpu.memory_space<smem>>
    %15 = vector.broadcast %14 : f32 to vector<1x8xf32>
    %16 = arith.addf %13, %15 : vector<1x8xf32>
    %c0_11 = arith.constant 0 : index
    %c0_12 = arith.constant 0 : index
    %17 = vector.load %arg6[%c0_11, %c0_12] : memref<1x8xf32, #tpu.memory_space<vmem>>, vector<1x8xf32>
    tpu.vector_store %arg6[%c0_11, %c0_12], %16 {strides = array<i32>} : memref<1x8xf32, #tpu.memory_space<vmem>>, vector<1x8xf32>,
    return
  }
  func.func @transform_0(%arg0: i32) -> (i32, i32) {
    %c0_i32 = arith.constant 0 : i32
    %c0_i32_0 = arith.constant 0 : i32
    return %c0_i32, %arg0 : i32, i32
  }
  func.func @transform_1(%arg0: i32) -> (i32, i32) {
    %c0_i32 = arith.constant 0 : i32
    %c0_i32_0 = arith.constant 0 : i32
    %c0_i32_1 = arith.constant 0 : i32
    return %c0_i32, %c0_i32_0 : i32, i32
  }
  func.func @transform_2(%arg0: i32) -> (i32, i32) {
    %c0_i32 = arith.constant 0 : i32
    %c0_i32_0 = arith.constant 0 : i32
    %c0_i32_1 = arith.constant 0 : i32
    return %c0_i32, %c0_i32_0 : i32, i32
  }
  func.func @transform_3(%arg0: i32) -> (i32, i32) {
    %c0_i32 = arith.constant 0 : i32
    %c0_i32_0 = arith.constant 0 : i32
    %c0_i32_1 = arith.constant 0 : i32
    return %c0_i32, %c0_i32_0 : i32, i32
  }
  func.func @transform_4(%arg0: i32) -> (i32, i32) {
    %c0_i32 = arith.constant 0 : i32
    %c0_i32_0 = arith.constant 0 : i32
    %c0_i32_1 = arith.constant 0 : i32
    return %c0_i32, %c0_i32_0 : i32, i32
  }
  func.func @transform_5(%arg0: i32) -> (i32, i32) {
    %c0_i32 = arith.constant 0 : i32
    %c0_i32_0 = arith.constant 0 : i32
    return %c0_i32, %arg0 : i32, i32
  }
}

</mosaic_0001>

<llo_original>
// kernel: tpu_custom_call.1
$region0: #{tpu_custom_call.1}
  #allocation0 [shape = 'u32[]', space=smem, size = 0x4, offset = 0x4, fixed_abs, tag = 'smem constant byte address 0x4 - core index']
  #allocation1 [shape = 'u32[144,128]{1,0:T(1,128)}', space=vmem, size = 0x12000, scoped, tag = 'internal scratch']
  #allocation2 [shape = 'f32[1,1]{1,0:T(1,128)S(6)}', space=smem, size = 0x200, scoped, tag = 'scoped memory for tpu_custom_call.1']
  %s0 = inlined_call_operand.vmem [shape: f32[4,8], index: 0, kind: input, shape index: {}]
  %s1 = inlined_call_operand.vmem [shape: bf16[128,4], index: 1, kind: input, shape index: {}]
  %s2 = inlined_call_operand.vmem [shape: f32[128,1], index: 2, kind: input, shape index: {}]
  %s3 = inlined_call_operand.vmem [shape: f32[128,1], index: 3, kind: input, shape index: {}]
  %s4 = inlined_call_operand.<no memory space> [shape: f32[1,1], index: 4, kind: input, shape index: {}]
  %s5 = inlined_call_operand.hbm [shape: f32[1,8], index: 5, kind: output, shape index: {}]
  %s6 = sld [smem:[#allocation0]]
  $region30: #{tpu_custom_call.1} parent=0
    _
  %s8 = ssub.s32 1, %s6
  %s9 = scalar_select 0, %s8, %s6
  %10 = sst [smem:[#allocation2]] %s4
  $region1: #{tpu_custom_call.1} parent=0
    #allocation3 [shape = 'u8[512]{0}', space=vmem, size = 0x400, scoped, tag = 'output window, operand 0, single buffered']
    #allocation4 [shape = 's32[1]{0}', space=sflag, size = 0x4, scoped, tag = 'scoped memory for tpu_custom_call.1']
    %11 = vsyncpa [#allocation4], 0
    // Predicated region
    $region2: #{tpu_custom_call.1} parent=1 // pred_check
      _
    $region3: #{tpu_custom_call.1} parent=1 // pred_check_branch
      %13 = sbr.rel (0) target = $region5
    $region4: #{tpu_custom_call.1} parent=1 // pred_region
      _
    $region5: #{tpu_custom_call.1} parent=1 // pred_fallthru
      _
    // Predicated region
    $region6: #{tpu_custom_call.1} parent=1 // pred_check
      _
    $region7: #{tpu_custom_call.1} parent=1 // pred_check_branch
      %15 = sbr.rel (0) target = $region9
    $region8: #{tpu_custom_call.1} parent=1 // pred_region
      _
    $region9: #{tpu_custom_call.1} parent=1 // pred_fallthru
      _
    // Predicated region
    $region10: #{tpu_custom_call.1} parent=1 // pred_check
      _
    $region11: #{tpu_custom_call.1} parent=1 // pred_check_branch
      %17 = sbr.rel (0) target = $region13
    $region12: #{tpu_custom_call.1} parent=1 // pred_region
      _
    $region13: #{tpu_custom_call.1} parent=1 // pred_fallthru
      _
    // Predicated region
    $region14: #{tpu_custom_call.1} parent=1 // pred_check
      _
    $region15: #{tpu_custom_call.1} parent=1 // pred_check_branch
      %19 = sbr.rel (0) target = $region17
    $region16: #{tpu_custom_call.1} parent=1 // pred_region
      _
    $region17: #{tpu_custom_call.1} parent=1 // pred_fallthru
      _
    // Predicated region
    $region18: #{tpu_custom_call.1} parent=1 // pred_check
      _
    $region19: #{tpu_custom_call.1} parent=1 // pred_check_branch
      %21 = sbr.rel (0) target = $region21
    $region20: #{tpu_custom_call.1} parent=1 // pred_region
      _
    $region21: #{tpu_custom_call.1} parent=1 // pred_fallthru
      _
    %v23 = vld [vmem:[%s0] sm:$0xf]
    %v24 = vpack.c.bf16 %v23, %v23
    %v25 = vld [vmem:[%s1] sm:$0xf]
    %v26 = vld [vmem:[%s1 + $0x4] sm:$0xf]
    %v27 = vld [vmem:[%s1 + $0x8] sm:$0xf]
    %v28 = vld [vmem:[%s1 + $0xc] sm:$0xf]
    %v29 = vld [vmem:[%s1 + $0x10] sm:$0xf]
    %v30 = vld [vmem:[%s1 + $0x14] sm:$0xf]
    %v31 = vld [vmem:[%s1 + $0x18] sm:$0xf]
    %v32 = vld [vmem:[%s1 + $0x1c] sm:$0xf]
    %v33 = vld [vmem:[%s1 + $0x20] sm:$0xf]
    %v34 = vld [vmem:[%s1 + $0x24] sm:$0xf]
    %v35 = vld [vmem:[%s1 + $0x28] sm:$0xf]
    %v36 = vld [vmem:[%s1 + $0x2c] sm:$0xf]
    %v37 = vld [vmem:[%s1 + $0x30] sm:$0xf]
    %v38 = vld [vmem:[%s1 + $0x34] sm:$0xf]
    %v39 = vld [vmem:[%s1 + $0x38] sm:$0xf]
    %v40 = vld [vmem:[%s1 + $0x3c] sm:$0xf]
    %v41 = vld [vmem:[%s2] sm:$0xff]
    %v42 = vld [vmem:[%s2 + $0x8] sm:$0xff]
    %v43 = vld [vmem:[%s2 + $0x10] sm:$0xff]
    %v44 = vld [vmem:[%s2 + $0x18] sm:$0xff]
    %v45 = vld [vmem:[%s2 + $0x20] sm:$0xff]
    %v46 = vld [vmem:[%s2 + $0x28] sm:$0xff]
    %v47 = vld [vmem:[%s2 + $0x30] sm:$0xff]
    %v48 = vld [vmem:[%s2 + $0x38] sm:$0xff]
    %v49 = vld [vmem:[%s2 + $0x40] sm:$0xff]
    %v50 = vld [vmem:[%s2 + $0x48] sm:$0xff]
    %v51 = vld [vmem:[%s2 + $0x50] sm:$0xff]
    %v52 = vld [vmem:[%s2 + $0x58] sm:$0xff]
    %v53 = vld [vmem:[%s2 + $0x60] sm:$0xff]
    %v54 = vld [vmem:[%s2 + $0x68] sm:$0xff]
    %v55 = vld [vmem:[%s2 + $0x70] sm:$0xff]
    %v56 = vld [vmem:[%s2 + $0x78] sm:$0xff]
    %58 = vset.pattern.permute.xlu0 0
    %59 = vperm.xlu0 %58, %v41
    %v60 = vpop.permute.xlu0 %59
    %63 = vset.pattern.permute.xlu0 0
    %64 = vperm.xlu0 %63, %v42
    %v65 = vpop.permute.xlu0 %64
    %68 = vset.pattern.permute.xlu0 0
    %69 = vperm.xlu0 %68, %v43
    %v70 = vpop.permute.xlu0 %69
    %73 = vset.pattern.permute.xlu0 0
    %74 = vperm.xlu0 %73, %v44
    %v75 = vpop.permute.xlu0 %74
    %78 = vset.pattern.permute.xlu0 0
    %79 = vperm.xlu0 %78, %v45
    %v80 = vpop.permute.xlu0 %79
    %83 = vset.pattern.permute.xlu0 0
    %84 = vperm.xlu0 %83, %v46
    %v85 = vpop.permute.xlu0 %84
    %88 = vset.pattern.permute.xlu0 0
    %89 = vperm.xlu0 %88, %v47
    %v90 = vpop.permute.xlu0 %89
    %93 = vset.pattern.permute.xlu0 0
    %94 = vperm.xlu0 %93, %v48
    %v95 = vpop.permute.xlu0 %94
    %98 = vset.pattern.permute.xlu0 0
    %99 = vperm.xlu0 %98, %v49
    %v100 = vpop.permute.xlu0 %99
    %103 = vset.pattern.permute.xlu0 0
    %104 = vperm.xlu0 %103, %v50
    %v105 = vpop.permute.xlu0 %104
    %108 = vset.pattern.permute.xlu0 0
    %109 = vperm.xlu0 %108, %v51
    %v110 = vpop.permute.xlu0 %109
    %113 = vset.pattern.permute.xlu0 0
    %114 = vperm.xlu0 %113, %v52
    %v115 = vpop.permute.xlu0 %114
    %118 = vset.pattern.permute.xlu0 0
    %119 = vperm.xlu0 %118, %v53
    %v120 = vpop.permute.xlu0 %119
    %123 = vset.pattern.permute.xlu0 0
    %124 = vperm.xlu0 %123, %v54
    %v125 = vpop.permute.xlu0 %124
    %128 = vset.pattern.permute.xlu0 0
    %129 = vperm.xlu0 %128, %v55
    %v130 = vpop.permute.xlu0 %129
    %133 = vset.pattern.permute.xlu0 0
    %134 = vperm.xlu0 %133, %v56
    %v135 = vpop.permute.xlu0 %134
    %v153 = vunpack.c.l.b16 %v25
    %v154 = vunpack.c.l.b16 %v26
    %v155 = vunpack.c.l.b16 %v27
    %v156 = vunpack.c.l.b16 %v28
    %v157 = vunpack.c.l.b16 %v29
    %v158 = vunpack.c.l.b16 %v30
    %v159 = vunpack.c.l.b16 %v31
    %v160 = vunpack.c.l.b16 %v32
    %v161 = vunpack.c.l.b16 %v33
    %v162 = vunpack.c.l.b16 %v34
    %v163 = vunpack.c.l.b16 %v35
    %v164 = vunpack.c.l.b16 %v36
    %v165 = vunpack.c.l.b16 %v37
    %v166 = vunpack.c.l.b16 %v38
    %v167 = vunpack.c.l.b16 %v39
    %v168 = vunpack.c.l.b16 %v40
    %v169 = vpack.c.b16 %v154, %v153
    %v170 = vpack.c.b16 %v156, %v155
    %v171 = vpack.c.b16 %v158, %v157
    %v172 = vpack.c.b16 %v160, %v159
    %v173 = vpack.c.b16 %v162, %v161
    %v174 = vpack.c.b16 %v164, %v163
    %v175 = vpack.c.b16 %v166, %v165
    %v176 = vpack.c.b16 %v168, %v167
    %vm177 = vcmask 31744
    %v179 = vsel %vm177, %v169, 0
    %v182 = vsel %vm177, %v170, 0
    %v185 = vsel %vm177, %v171, 0
    %v188 = vsel %vm177, %v172, 0
    %v191 = vsel %vm177, %v173, 0
    %v194 = vsel %vm177, %v174, 0
    %v197 = vsel %vm177, %v175, 0
    %v200 = vsel %vm177, %v176, 0
    %vm202 = vcmask 1041408
    %v204 = vsel %vm202, %v24, 0
    %206 = vmatprep.subr.bf16.mxu0 0
    %207 = vmatpush1.bf16.msra.mxu0 0
    %208 = vmatprep.subr.bf16.mxu0 0
    %209 = vmatpush1.bf16.msra.mxu0 0
    %210 = vmatprep.subr.bf16.mxu0 0
    %211 = vmatpush1.bf16.msra.mxu0 0
    %212 = vmatprep.subr.bf16.mxu0 0
    %213 = vmatpush1.bf16.msra.mxu0 0
    %214 = vmatprep.subr.bf16.mxu0 0
    %215 = vmatpush1.bf16.msra.mxu0 0
    %216 = vmatprep.subr.bf16.mxu0 0
    %217 = vmatpush1.bf16.msra.mxu0 0
    %218 = vmatprep.subr.bf16.mxu0 0
    %219 = vmatpush1.bf16.msra.mxu0 0
    %220 = vmatprep.subr.bf16.mxu0 0
    %221 = vmatpush1.bf16.msra.mxu0 %v204
    %222 = vmatprep.subr.bf16.mxu0 0
    %223 = vmatpush2.bf16.msra.mxu0 0
    %224 = vmatprep.subr.bf16.mxu0 0
    %225 = vmatpush2.bf16.msra.mxu0 0
    %226 = vmatprep.subr.bf16.mxu0 0
    %227 = vmatpush2.bf16.msra.mxu0 0
    %228 = vmatprep.subr.bf16.mxu0 0
    %229 = vmatpush2.bf16.msra.mxu0 0
    %230 = vmatprep.subr.bf16.mxu0 0
    %231 = vmatpush2.bf16.msra.mxu0 0
    %232 = vmatprep.subr.bf16.mxu0 0
    %233 = vmatpush2.bf16.msra.mxu0 0
    %234 = vmatprep.subr.bf16.mxu0 0
    %235 = vmatpush2.bf16.msra.mxu0 0
    %236 = vmatprep.subr.bf16.mxu0 0
    %237 = vmatpush2.bf16.msra.mxu0 0
    %238 = vmatprep.mubr.bf16.mxu0 0
    %239 = vmatmul.mubr.bf16.gmra.mxu0 %v179
    %v240 = vpop.f32.mrf.mxu0
    %v241 = vadd.f32 %v60, %v240
    %v242 = vpop.f32.mrf.mxu0
    %v243 = vpop.f32.mrf.mxu0
    %v244 = vadd.f32 %v65, %v243
    %v245 = vpop.f32.mrf.mxu0
    %246 = vmatprep.mubr.bf16.mxu0 0
    %247 = vmatmul.mubr.bf16.gmra.mxu0 %v182
    %v248 = vpop.f32.mrf.mxu0
    %v249 = vadd.f32 %v70, %v248
    %v250 = vpop.f32.mrf.mxu0
    %v251 = vpop.f32.mrf.mxu0
    %v252 = vadd.f32 %v75, %v251
    %v253 = vpop.f32.mrf.mxu0
    %254 = vmatprep.mubr.bf16.mxu0 0
    %255 = vmatmul.mubr.bf16.gmra.mxu0 %v185
    %v256 = vpop.f32.mrf.mxu0
    %v257 = vadd.f32 %v80, %v256
    %v258 = vpop.f32.mrf.mxu0
    %v259 = vpop.f32.mrf.mxu0
    %v260 = vadd.f32 %v85, %v259
    %v261 = vpop.f32.mrf.mxu0
    %262 = vmatprep.mubr.bf16.mxu0 0
    %263 = vmatmul.mubr.bf16.gmra.mxu0 %v188
    %v264 = vpop.f32.mrf.mxu0
    %v265 = vadd.f32 %v90, %v264
    %v266 = vpop.f32.mrf.mxu0
    %v267 = vpop.f32.mrf.mxu0
    %v268 = vadd.f32 %v95, %v267
    %v269 = vpop.f32.mrf.mxu0
    %270 = vmatprep.mubr.bf16.mxu0 0
    %271 = vmatmul.mubr.bf16.gmra.mxu0 %v191
    %v272 = vpop.f32.mrf.mxu0
    %v273 = vadd.f32 %v100, %v272
    %v274 = vpop.f32.mrf.mxu0
    %v275 = vpop.f32.mrf.mxu0
    %v276 = vadd.f32 %v105, %v275
    %v277 = vpop.f32.mrf.mxu0
    %278 = vmatprep.mubr.bf16.mxu0 0
    %279 = vmatmul.mubr.bf16.gmra.mxu0 %v194
    %v280 = vpop.f32.mrf.mxu0
    %v281 = vadd.f32 %v110, %v280
    %v282 = vpop.f32.mrf.mxu0
    %v283 = vpop.f32.mrf.mxu0
    %v284 = vadd.f32 %v115, %v283
    %v285 = vpop.f32.mrf.mxu0
    %286 = vmatprep.mubr.bf16.mxu0 0
    %287 = vmatmul.mubr.bf16.gmra.mxu0 %v197
    %v288 = vpop.f32.mrf.mxu0
    %v289 = vadd.f32 %v120, %v288
    %v290 = vpop.f32.mrf.mxu0
    %v291 = vpop.f32.mrf.mxu0
    %v292 = vadd.f32 %v125, %v291
    %v293 = vpop.f32.mrf.mxu0
    %294 = vmatprep.mubr.bf16.mxu0 0
    %295 = vmatmul.mubr.bf16.gmra.mxu0 %v200
    %v296 = vpop.f32.mrf.mxu0
    %v297 = vadd.f32 %v130, %v296
    %v298 = vpop.f32.mrf.mxu0
    %v299 = vpop.f32.mrf.mxu0
    %v300 = vadd.f32 %v135, %v299
    %v301 = vpop.f32.mrf.mxu0
    %302 = vdwg.mxu0
    %v303 = vmax.f32 %v241, 0.0
    %v304 = vmax.f32 %v244, 0.0
    %v305 = vmax.f32 %v249, 0.0
    %v306 = vmax.f32 %v252, 0.0
    %v307 = vmax.f32 %v257, 0.0
    %v308 = vmax.f32 %v260, 0.0
    %v309 = vmax.f32 %v265, 0.0
    %v310 = vmax.f32 %v268, 0.0
    %v311 = vmax.f32 %v273, 0.0
    %v312 = vmax.f32 %v276, 0.0
    %v313 = vmax.f32 %v281, 0.0
    %v314 = vmax.f32 %v284, 0.0
    %v315 = vmax.f32 %v289, 0.0
    %v316 = vmax.f32 %v292, 0.0
    %v317 = vmax.f32 %v297, 0.0
    %v318 = vmax.f32 %v300, 0.0
    %v319 = vld [vmem:[%s3] sm:$0xff]
    %v320 = vld [vmem:[%s3 + $0x8] sm:$0xff]
    %v321 = vld [vmem:[%s3 + $0x10] sm:$0xff]
    %v322 = vld [vmem:[%s3 + $0x18] sm:$0xff]
    %v323 = vld [vmem:[%s3 + $0x20] sm:$0xff]
    %v324 = vld [vmem:[%s3 + $0x28] sm:$0xff]
    %v325 = vld [vmem:[%s3 + $0x30] sm:$0xff]
    %v326 = vld [vmem:[%s3 + $0x38] sm:$0xff]
    %v327 = vld [vmem:[%s3 + $0x40] sm:$0xff]
    %v328 = vld [vmem:[%s3 + $0x48] sm:$0xff]
    %v329 = vld [vmem:[%s3 + $0x50] sm:$0xff]
    %v330 = vld [vmem:[%s3 + $0x58] sm:$0xff]
    %v331 = vld [vmem:[%s3 + $0x60] sm:$0xff]
    %v332 = vld [vmem:[%s3 + $0x68] sm:$0xff]
    %v333 = vld [vmem:[%s3 + $0x70] sm:$0xff]
    %v334 = vld [vmem:[%s3 + $0x78] sm:$0xff]
    %336 = vset.pattern.permute.xlu0 0
    %337 = vperm.xlu0 %336, %v319
    %v338 = vpop.permute.xlu0 %337
    %341 = vset.pattern.permute.xlu0 0
    %342 = vperm.xlu0 %341, %v320
    %v343 = vpop.permute.xlu0 %342
    %346 = vset.pattern.permute.xlu0 0
    %347 = vperm.xlu0 %346, %v321
    %v348 = vpop.permute.xlu0 %347
    %351 = vset.pattern.permute.xlu0 0
    %352 = vperm.xlu0 %351, %v322
    %v353 = vpop.permute.xlu0 %352
    %356 = vset.pattern.permute.xlu0 0
    %357 = vperm.xlu0 %356, %v323
    %v358 = vpop.permute.xlu0 %357
    %361 = vset.pattern.permute.xlu0 0
    %362 = vperm.xlu0 %361, %v324
    %v363 = vpop.permute.xlu0 %362
    %366 = vset.pattern.permute.xlu0 0
    %367 = vperm.xlu0 %366, %v325
    %v368 = vpop.permute.xlu0 %367
    %371 = vset.pattern.permute.xlu0 0
    %372 = vperm.xlu0 %371, %v326
    %v373 = vpop.permute.xlu0 %372
    %376 = vset.pattern.permute.xlu0 0
    %377 = vperm.xlu0 %376, %v327
    %v378 = vpop.permute.xlu0 %377
    %381 = vset.pattern.permute.xlu0 0
    %382 = vperm.xlu0 %381, %v328
    %v383 = vpop.permute.xlu0 %382
    %386 = vset.pattern.permute.xlu0 0
    %387 = vperm.xlu0 %386, %v329
    %v388 = vpop.permute.xlu0 %387
    %391 = vset.pattern.permute.xlu0 0
    %392 = vperm.xlu0 %391, %v330
    %v393 = vpop.permute.xlu0 %392
    %396 = vset.pattern.permute.xlu0 0
    %397 = vperm.xlu0 %396, %v331
    %v398 = vpop.permute.xlu0 %397
    %401 = vset.pattern.permute.xlu0 0
    %402 = vperm.xlu0 %401, %v332
    %v403 = vpop.permute.xlu0 %402
    %406 = vset.pattern.permute.xlu0 0
    %407 = vperm.xlu0 %406, %v333
    %v408 = vpop.permute.xlu0 %407
    %411 = vset.pattern.permute.xlu0 0
    %412 = vperm.xlu0 %411, %v334
    %v413 = vpop.permute.xlu0 %412
    %v415 = vmul.f32 %v303, %v338
    %v416 = vmul.f32 %v304, %v343
    %v417 = vmul.f32 %v305, %v348
    %v418 = vmul.f32 %v306, %v353
    %v419 = vmul.f32 %v307, %v358
    %v420 = vmul.f32 %v308, %v363
    %v421 = vmul.f32 %v309, %v368
    %v422 = vmul.f32 %v310, %v373
    %v423 = vmul.f32 %v311, %v378
    %v424 = vmul.f32 %v312, %v383
    %v425 = vmul.f32 %v313, %v388
    %v426 = vmul.f32 %v314, %v393
    %v427 = vmul.f32 %v315, %v398
    %v428 = vmul.f32 %v316, %v403
    %v429 = vmul.f32 %v317, %v408
    %v430 = vmul.f32 %v318, %v413
    %vm431 = vcmask 64512
    %v432 = vsel %vm431, %v415, 0.0
    %v433 = vsel %vm431, %v416, 0.0
    %v434 = vadd.f32 %v432, %v433
    %v435 = vsel %vm431, %v417, 0.0
    %v436 = vadd.f32 %v434, %v435
    %v437 = vsel %vm431, %v418, 0.0
    %v438 = vadd.f32 %v436, %v437
    %v439 = vsel %vm431, %v419, 0.0
    %v440 = vadd.f32 %v438, %v439
    %v441 = vsel %vm431, %v420, 0.0
    %v442 = vadd.f32 %v440, %v441
    %v443 = vsel %vm431, %v421, 0.0
    %v444 = vadd.f32 %v442, %v443
    %v445 = vsel %vm431, %v422, 0.0
    %v446 = vadd.f32 %v444, %v445
    %v447 = vsel %vm431, %v423, 0.0
    %v448 = vadd.f32 %v446, %v447
    %v449 = vsel %vm431, %v424, 0.0
    %v450 = vadd.f32 %v448, %v449
    %v451 = vsel %vm431, %v425, 0.0
    %v452 = vadd.f32 %v450, %v451
    %v453 = vsel %vm431, %v426, 0.0
    %v454 = vadd.f32 %v452, %v453
    %v455 = vsel %vm431, %v427, 0.0
    %v456 = vadd.f32 %v454, %v455
    %v457 = vsel %vm431, %v428, 0.0
    %v458 = vadd.f32 %v456, %v457
    %v459 = vsel %vm431, %v429, 0.0
    %v460 = vadd.f32 %v458, %v459
    %v461 = vsel %vm431, %v430, 0.0
    %v462 = vadd.f32 %v460, %v461
    %v463 = vrot.slane %v462, 4
    %v464 = vadd.f32 %v462, %v463
    %v465 = vrot.slane %v464, 2
    %v466 = vadd.f32 %v464, %v465
    %v467 = vrot.slane %v466, 1
    %v468 = vadd.f32 %v466, %v467
    %s469 = sld [smem:[#allocation2]]
    %v470 = vstv %s469
    %v471 = vadd.f32 %v468, %v470
    %vm472 = vcmask 57344
    %473 = vst.msk [vmem:[#allocation3] sm:$0x1] %vm472, %v471
    // Predicated region
    $region22: #{tpu_custom_call.1} parent=1 // pred_check
      _
    $region23: #{tpu_custom_call.1} parent=1 // pred_check_branch
      %475 = sbr.rel (0) target = $region25
    $region24: #{tpu_custom_call.1} parent=1 // pred_region
      %s477 = ssub.s32 16, 16
      %478 = vsyncadd [#allocation4], %s477
      %s480 = sshll.u32 [#allocation3], 4
      %s481 = int_to_ptr.vmem [resolvable:$true] %s480
      %483 = dma.vmem_to_hbm [thread:$0]  %s481, 16, %s5, [#allocation4]
    $region25: #{tpu_custom_call.1} parent=1 // pred_fallthru
      _
    // Predicated region
    $region26: #{tpu_custom_call.1} parent=1 // pred_check
      _
    $region27: #{tpu_custom_call.1} parent=1 // pred_check_branch
      %485 = sbr.rel (0) target = $region29
    $region28: #{tpu_custom_call.1} parent=1 // pred_region
      %486 = dma.done [#allocation4], 16
    $region29: #{tpu_custom_call.1} parent=1 // pred_fallthru
      _
    %487 = vsyncpa [#allocation4], 1

</llo_original>
